<compile_context>
chip_gen: v7x
topology: tpu7x:2x2x1
jax: 0.10.0
libtpu: 0.0.40
codegen_flags: <defaults>
</compile_context>

<pallas_src>
import functools
import numpy as np
import jax
import jax.numpy as jnp
from jax.experimental import pallas as pl
from jax.experimental.pallas import tpu as pltpu

K = 6                                   # Conv1d kernel size
PAD_L, PAD_R = 2, 3                     # PyTorch 'same' padding for kernel_size=6 (left=2, right=3)
HALO = K - 1                            # 5: extra h columns needed by conv2
HALO_L, HALO_R = 2 * PAD_L, 2 * PAD_R   # 4, 6: input-window halo of the fused conv1 -> conv2 chain


# --------------------------------- kernel ---------------------------------
def _decoder_block_kernel(xw_ref, sw_ref, wup_ref, w1_ref, s1_ref, h1_ref,
                          w2h_ref, w2us_ref, s2_ref, h2_ref,
                          out_ref, up_scr, h_scr, *, tl, l_skip):
    f32 = jnp.float32
    tl5 = tl + HALO                     # width of the extended (halo-recompute) h region
    t = pl.program_id(1)

    # ---- ConvTranspose1d(k=2, stride=2) + bias + pad_input zero-extension: ONE MXU matmul.
    #      The augmented ones-row of the window carries the bias only on valid columns, so columns
    #      outside the true up range come out exactly 0 -- no masking needed.
    up = jnp.dot(wup_ref[...], xw_ref[...], preferred_element_type=f32)
    up_scr[...] = up.astype(up_scr.dtype)                      # full data write, no zero fill

    # ---- single im2col operand, shared by conv1 and conv2's up/skip half.
    #      rows [j*C,(j+1)*C) = up tap j; rows [(K+j)*C, ...) = skip tap j; columns cover the
    #      extended region [t*tl - 2, t*tl + tl + 3) so the h halo can be recomputed locally.
    cols = jnp.concatenate(
        [up_scr[:, pl.ds(j, tl5)] for j in range(K)]
        + [sw_ref[:, pl.ds(j, tl5)] for j in range(K)], axis=0)

    acc1 = jnp.dot(w1_ref[...], cols, preferred_element_type=f32)
    # conv2's up/skip contribution reuses the SAME operand; its output is the conv1 grid shifted
    # by PAD_L columns (costs +HALO/tl extra MXU columns, ~1%).
    acc2_us = jnp.dot(w2us_ref[...], cols, preferred_element_type=f32)[:, PAD_L:PAD_L + tl]

    # ---- bn1 (folded scale/shift) + ReLU; Dropout1d(p=0.1) == identity in eval mode.
    h = jnp.maximum(acc1 * s1_ref[...] + h1_ref[...], 0.0)
    # conv2 'same'-pads the true length-l_skip h with zeros: zero halo columns outside [0, l_skip).
    col = jax.lax.broadcasted_iota(jnp.int32, h.shape, 1) + (t * tl - PAD_L)
    h = jnp.where((col >= 0) & (col < l_skip), h, 0.0)
    h_scr[...] = h.astype(h_scr.dtype)                         # full data write, no zero fill

    h_cols = jnp.concatenate([h_scr[:, pl.ds(j, tl)] for j in range(K)], axis=0)
    acc2 = acc2_us + jnp.dot(w2h_ref[...], h_cols, preferred_element_type=f32)
    out_ref[...] = jnp.maximum(acc2 * s2_ref[...] + h2_ref[...], 0.0).astype(out_ref.dtype)


# ---------------------------- parameter prep (run once) ----------------------------
def prepare_decoder_block_params(p, eps=1e-5, compute_dtype=jnp.bfloat16):
    """Fold BatchNorm (running stats) into per-channel scale/shift and repack the conv weights into
    the kernel's im2col layout.  Hoisted out of the per-call wrapper (review item)."""
    f32 = jnp.float32
    Wt = jnp.asarray(p['wt'], f32)                       # (in_c, out_c, 2)
    in_c, out_c, _ = Wt.shape
    bt = jnp.asarray(p['bt'], f32).reshape(out_c, 1)
    # ConvTranspose as one dense matmul over the dilated input; bias rides on the ones-row.
    w_up = jnp.concatenate([Wt[:, :, 0].T, Wt[:, :, 1].T, bt], axis=1)   # (out_c, 2*in_c + 1)

    def taps_to_cols(Wg):    # (O, Cg, K) -> (O, K*Cg); column j*Cg + c = Wg[o, c, j]
        O, Cg, Kk = Wg.shape
        return jnp.transpose(Wg, (0, 2, 1)).reshape(O, Kk * Cg)

    W1 = jnp.asarray(p['W1'], f32)                       # (out_c, 2*out_c, K): [up, skip]
    w1 = jnp.concatenate([taps_to_cols(W1[:, :out_c]), taps_to_cols(W1[:, out_c:])], axis=1)
    W2 = jnp.asarray(p['W2'], f32)                       # (out_c, 3*out_c, K): [h, up, skip]
    w2_h = taps_to_cols(W2[:, :out_c])
    w2_us = jnp.concatenate([taps_to_cols(W2[:, out_c:2 * out_c]),
                             taps_to_cols(W2[:, 2 * out_c:])], axis=1)

    s1 = jnp.asarray(p['g1'], f32) / jnp.sqrt(jnp.asarray(p['rv1'], f32) + eps)
    h1 = (jnp.asarray(p['b1'], f32) - jnp.asarray(p['rm1'], f32)) * s1 + jnp.asarray(p['be1'], f32)
    s2 = jnp.asarray(p['g2'], f32) / jnp.sqrt(jnp.asarray(p['rv2'], f32) + eps)
    h2 = (jnp.asarray(p['b2'], f32) - jnp.asarray(p['rm2'], f32)) * s2 + jnp.asarray(p['be2'], f32)

    return dict(
        w_up=w_up.astype(compute_dtype),
        w1=w1.astype(compute_dtype),
        w2_h=w2_h.astype(compute_dtype),
        w2_us=w2_us.astype(compute_dtype),
        s1=s1.reshape(out_c, 1), h1=h1.reshape(out_c, 1),
        s2=s2.reshape(out_c, 1), h2=h2.reshape(out_c, 1),
    )


# --------------------------------- forward wrapper ---------------------------------
def decoder_block_pallas(x_ncw, skip_ncw, prep, *, tile_l=512,
                         out_dtype=jnp.bfloat16, vmem_limit_bytes=48 * 1024 * 1024):
    """Fused decoder_block forward (eval mode), NCW in / NCW out.

    tile_l: L tile (lane) size; multiple of 128 when L_skip is tiled.  Guidance:
      v7x (64 MiB VMEM/TC): tile_l ~512 keeps double-buffered windows + im2col well under ~48 MiB.
      v6e / v5e (128 MiB):  tile_l ~1024 and vmem_limit_bytes up to ~96 MiB amortize per-step cost;
      bump the skip window to pl.Buffered(3) there if the DMA is exposed.
    """
    cdt = jnp.bfloat16
    N, in_c, L_in = x_ncw.shape
    _, out_c, L_skip = skip_ncw.shape
    L_up = 2 * L_in
    assert L_skip >= L_up, "pad_input only zero-pads (never crops): need L_skip >= 2*L_in"
    assert prep['w_up'].shape == (out_c, 2 * in_c + 1)

    if L_skip <= tile_l:
        tl, nt = L_skip, 1
    else:
        assert tile_l % 128 == 0, "tile_l must be a multiple of 128 when L is tiled"
        tl, nt = tile_l, pl.cdiv(L_skip, tile_l)
    L_grid = nt * tl
    w_in = tl + HALO_L + HALO_R          # per-tile input window width (= tl + 10)
    tl5 = tl + HALO

    def window(arr_ext):                 # (N, C, L_grid + 10) -> (N, nt, C, w_in), overlapping windows
        if nt == 1:
            return arr_ext[:, None]
        # TODO(synk): for very large nt build the windows with a strided gather instead of nt slices.
        return jnp.stack([arr_ext[..., t * tl: t * tl + w_in] for t in range(nt)], axis=1)

    # skip: cast to bf16 and zero-pad with the fused-conv halo once, then slice overlapping windows.
    skip_ext = jnp.pad(skip_ncw.astype(cdt),
                       ((0, 0), (0, 0), (HALO_L, L_grid + HALO_R - L_skip)))
    sw = window(skip_ext)

    # stride-2 dilated x (+ ones-row carrying ConvTranspose bias / pad_input validity), halo-padded.
    zeros = jnp.zeros_like(x_ncw)
    ev = jnp.concatenate([x_ncw, zeros], axis=1)          # -> even output columns
    od = jnp.concatenate([zeros, x_ncw], axis=1)          # -> odd output columns
    x_up = jnp.stack([ev, od], axis=-1).reshape(N, 2 * in_c, L_up)
    ones = jnp.ones((N, 1, L_up), x_ncw.dtype)
    x_up_ext = jnp.pad(jnp.concatenate([x_up, ones], axis=1).astype(cdt),
                       ((0, 0), (0, 0), (HALO_L, L_grid + HALO_R - L_up)))
    xw = window(x_up_ext)

    kernel = functools.partial(_decoder_block_kernel, tl=tl, l_skip=L_skip)

    def full2d(a):
        return pl.BlockSpec(a.shape, lambda n, t: (0, 0))

    args = (xw, sw, prep['w_up'], prep['w1'], prep['s1'], prep['h1'],
            prep['w2_h'], prep['w2_us'], prep['s2'], prep['h2'])

    in_specs = [
        pl.BlockSpec((None, None, 2 * in_c + 1, w_in), lambda n, t: (n, t, 0, 0)),
        pl.BlockSpec((None, None, out_c, w_in), lambda n, t: (n, t, 0, 0)),
    ] + [full2d(a) for a in args[2:]]

    out = pl.pallas_call(
        kernel,
        out_shape=jax.ShapeDtypeStruct((N, out_c, L_skip), out_dtype),
        grid_spec=pltpu.PrefetchScalarGridSpec(
            num_scalar_prefetch=0,
            grid=(N, nt),
            in_specs=in_specs,
            out_specs=pl.BlockSpec((None, out_c, tl), lambda n, t: (n, 0, t)),
            scratch_shapes=[pltpu.VMEM((out_c, w_in), cdt),     # up (ConvTranspose output) window
                            pltpu.VMEM((out_c, tl5), cdt)],     # extended h (conv1 output + halo)
        ),
        compiler_params=pltpu.CompilerParams(
            dimension_semantics=("parallel", "parallel"),
            vmem_limit_bytes=vmem_limit_bytes),
    )(*args)
    return out   # (N, out_c, L_skip), NCW


# ---------------- pure-numpy reference (PyTorch semantics, eval mode) ----------------
def ref_decoder_block(x, skip, p):
    x = np.asarray(x, np.float64)
    skip = np.asarray(skip, np.float64)
    Wt = np.asarray(p['wt'], np.float64)
    bt = np.asarray(p['bt'], np.float64)
    N, Cin, L = x.shape
    Cout = Wt.shape[1]
    Ls = skip.shape[-1]

    up = np.zeros((N, Cout, 2 * L))
    for k in range(2):
        up[:, :, k::2] = np.einsum('ncl,co->nol', x, Wt[:, :, k])
    up = up + bt[None, :, None]

    diff = Ls - up.shape[-1]
    if diff:
        up = np.pad(up, ((0, 0), (0, 0), (0, diff)))      # pad_input
    cat0 = np.concatenate([up, skip], axis=1)

    def conv1d_same(xin, W, b):
        n, c, l = xin.shape
        xp = np.pad(xin, ((0, 0), (0, 0), (PAD_L, PAD_R)))
        out = np.zeros((n, W.shape[0], l))
        for j in range(K):
            out += np.einsum('ncl,oc->nol', xp[:, :, j:j + l], np.asarray(W, np.float64)[:, :, j])
        return out + np.asarray(b, np.float64)[None, :, None]

    def bn(xin, g, be, rm, rv):
        g, be, rm, rv = [np.asarray(v, np.float64)[None, :, None] for v in (g, be, rm, rv)]
        return (xin - rm) / np.sqrt(rv + 1e-5) * g + be

    h = np.maximum(bn(conv1d_same(cat0, p['W1'], p['b1']), p['g1'], p['be1'], p['rm1'], p['rv1']), 0.0)
    cat1 = np.concatenate([h, cat0], axis=1)
    out = np.maximum(bn(conv1d_same(cat1, p['W2'], p['b2']), p['g2'], p['be2'], p['rm2'], p['rv2']), 0.0)
    return out


if __name__ == "__main__":
    N, in_c, out_c = 2, 8, 4
    L_in, L_skip = 8, 17   # odd skip length exercises pad_input

    key = jax.random.PRNGKey(0)
    ks = jax.random.split(key, 16)
    f = jnp.float32
    p = dict(
        wt=jax.random.normal(ks[0], (in_c, out_c, 2), f) * 0.2,           # ConvTranspose1d weight
        bt=jax.random.normal(ks[1], (out_c,), f) * 0.1,
        W1=jax.random.normal(ks[2], (out_c, 2 * out_c, K), f) * 0.2,      # ConvBlock.conv1 weight
        b1=jax.random.normal(ks[3], (out_c,), f) * 0.1,
        g1=1.0 + 0.1 * jax.random.normal(ks[4], (out_c,), f),             # bn1 gamma/beta/stats
        be1=0.1 * jax.random.normal(ks[5], (out_c,), f),
        rm1=0.1 * jax.random.normal(ks[6], (out_c,), f),
        rv1=1.0 + 0.1 * jnp.abs(jax.random.normal(ks[7], (out_c,), f)),
        W2=jax.random.normal(ks[8], (out_c, 3 * out_c, K), f) * 0.2,      # ConvBlock.conv2 weight
        b2=jax.random.normal(ks[9], (out_c,), f) * 0.1,
        g2=1.0 + 0.1 * jax.random.normal(ks[10], (out_c,), f),
        be2=0.1 * jax.random.normal(ks[11], (out_c,), f),
        rm2=0.1 * jax.random.normal(ks[12], (out_c,), f),
        rv2=1.0 + 0.1 * jnp.abs(jax.random.normal(ks[13], (out_c,), f)),
    )
    x = jax.random.normal(ks[14], (N, in_c, L_in), f)          # decoder input  (NCW)
    skip = jax.random.normal(ks[15], (N, out_c, L_skip), f)    # skip connection (NCW)

    prep = prepare_decoder_block_params(p)                     # one-time weight repack / BN fold
    fwd = jax.jit(functools.partial(decoder_block_pallas, tile_l=512))
    out = jax.block_until_ready(fwd(x, skip, prep))

    ref = ref_decoder_block(np.asarray(x), np.asarray(skip),
                            {k: np.asarray(v) for k, v in p.items()})
    # bf16 MXU operands / bf16 output (f32 accumulation) -> ~1e-2 relative accuracy vs f64 reference.
    out_f32 = np.asarray(out.astype(jnp.float32))
    np.testing.assert_allclose(out_f32, ref, rtol=5e-2, atol=5e-2)
    print("KERNEL_OK")
</pallas_src>

<mosaic_0001>
module attributes {stable_mosaic.version = 11 : i64} {
  func.func @_decoder_block_kernel(%arg0: i32, %arg1: i32, %arg2: memref<1x1x17x27xbf16, #tpu.memory_space<vmem>>, %arg3: memref<1x1x4x27xbf16, #tpu.memory_space<vmem>>, %arg4: memref<4x17xbf16, #tpu.memory_space<vmem>>, %arg5: memref<4x48xbf16, #tpu.memory_space<vmem>>, %arg6: memref<4x1xf32, #tpu.memory_space<vmem>>, %arg7: memref<4x1xf32, #tpu.memory_space<vmem>>, %arg8: memref<4x24xbf16, #tpu.memory_space<vmem>>, %arg9: memref<4x48xbf16, #tpu.memory_space<vmem>>, %arg10: memref<4x1xf32, #tpu.memory_space<vmem>>, %arg11: memref<4x1xf32, #tpu.memory_space<vmem>>, %arg12: memref<1x4x17xbf16, #tpu.memory_space<vmem>>, %arg13: memref<4x27xbf16, #tpu.memory_space<vmem>>, %arg14: memref<4x22xbf16, #tpu.memory_space<vmem>>) attributes {dimension_semantics = [#tpu.dimension_semantics<parallel>, #tpu.dimension_semantics<parallel>], iteration_bounds = array<i64: 2, 1>, scalar_prefetch = 0 : i64, scratch_operands = 2 : i64, tpu.core_type = #tpu.core_type<tc>, window_params = [{transform_indices = @transform_0, window_bounds = array<i64: 1, 1, 17, 27>}, {transform_indices = @transform_1, window_bounds = array<i64: 1, 1, 4, 27>}, {pipeline_mode = #tpu.pipeline_mode<synchronous>, transform_indices = @transform_2, window_bounds = array<i64: 4, 17>}, {pipeline_mode = #tpu.pipeline_mode<synchronous>, transform_indices = @transform_3, window_bounds = array<i64: 4, 48>}, {pipeline_mode = #tpu.pipeline_mode<synchronous>, transform_indices = @transform_4, window_bounds = array<i64: 4, 1>}, {pipeline_mode = #tpu.pipeline_mode<synchronous>, transform_indices = @transform_5, window_bounds = array<i64: 4, 1>}, {pipeline_mode = #tpu.pipeline_mode<synchronous>, transform_indices = @transform_6, window_bounds = array<i64: 4, 24>}, {pipeline_mode = #tpu.pipeline_mode<synchronous>, transform_indices = @transform_7, window_bounds = array<i64: 4, 48>}, {pipeline_mode = #tpu.pipeline_mode<synchronous>, transform_indices = @transform_8, window_bounds = array<i64: 4, 1>}, {pipeline_mode = #tpu.pipeline_mode<synchronous>, transform_indices = @transform_9, window_bounds = array<i64: 4, 1>}, {transform_indices = @transform_10, window_bounds = array<i64: 1, 4, 17>}]} {
    %c0 = arith.constant 0 : index
    %c0_0 = arith.constant 0 : index
    %0 = vector.load %arg4[%c0, %c0_0] : memref<4x17xbf16, #tpu.memory_space<vmem>>, vector<4x17xbf16>
    %c0_1 = arith.constant 0 : index
    %c0_2 = arith.constant 0 : index
    %c0_3 = arith.constant 0 : index
    %c0_4 = arith.constant 0 : index
    %1 = vector.load %arg2[%c0_1, %c0_2, %c0_3, %c0_4] : memref<1x1x17x27xbf16, #tpu.memory_space<vmem>>, vector<1x1x17x27xbf16>
    %2 = vector.shape_cast %1 : vector<1x1x17x27xbf16> to vector<17x27xbf16>
    %cst = arith.constant dense<0.000000e+00> : vector<4x27xf32>
    %3 = tpu.matmul %0, %2, %cst {dimension_numbers = #tpu.dot_dimension_numbers<[1], [0], [0], [1], [0, 0, 1, 1], [], []>} : vector<4x17xbf16>, vector<17x27xbf16>, vector<4x27xf32> -> vector<4x27xf32>
    %4 = arith.truncf %3 : vector<4x27xf32> to vector<4x27xbf16>
    %c0_5 = arith.constant 0 : index
    %c0_6 = arith.constant 0 : index
    %5 = vector.load %arg13[%c0_5, %c0_6] : memref<4x27xbf16, #tpu.memory_space<vmem>>, vector<4x27xbf16>
    tpu.vector_store %arg13[%c0_5, %c0_6], %4 {strides = array<i32>} : memref<4x27xbf16, #tpu.memory_space<vmem>>, vector<4x27xbf16>,
    %c0_7 = arith.constant 0 : index
    %c0_8 = arith.constant 0 : index
    %6 = vector.load %arg13[%c0_7, %c0_8] : memref<4x27xbf16, #tpu.memory_space<vmem>>, vector<4x22xbf16>
    %c0_9 = arith.constant 0 : index
    %c1 = arith.constant 1 : index
    %7 = vector.load %arg13[%c0_9, %c1] : memref<4x27xbf16, #tpu.memory_space<vmem>>, vector<4x22xbf16>
    %c0_10 = arith.constant 0 : index
    %c2 = arith.constant 2 : index
    %8 = vector.load %arg13[%c0_10, %c2] : memref<4x27xbf16, #tpu.memory_space<vmem>>, vector<4x22xbf16>
    %c0_11 = arith.constant 0 : index
    %c3 = arith.constant 3 : index
    %9 = vector.load %arg13[%c0_11, %c3] : memref<4x27xbf16, #tpu.memory_space<vmem>>, vector<4x22xbf16>
    %c0_12 = arith.constant 0 : index
    %c4 = arith.constant 4 : index
    %10 = vector.load %arg13[%c0_12, %c4] : memref<4x27xbf16, #tpu.memory_space<vmem>>, vector<4x22xbf16>
    %c0_13 = arith.constant 0 : index
    %c5 = arith.constant 5 : index
    %11 = vector.load %arg13[%c0_13, %c5] : memref<4x27xbf16, #tpu.memory_space<vmem>>, vector<4x22xbf16>
    %c0_14 = arith.constant 0 : index
    %c0_15 = arith.constant 0 : index
    %c0_16 = arith.constant 0 : index
    %c0_17 = arith.constant 0 : index
    %12 = vector.load %arg3[%c0_14, %c0_15, %c0_16, %c0_17] : memref<1x1x4x27xbf16, #tpu.memory_space<vmem>>, vector<1x1x4x22xbf16>
    %13 = vector.shape_cast %12 : vector<1x1x4x22xbf16> to vector<4x22xbf16>
    %c0_18 = arith.constant 0 : index
    %c0_19 = arith.constant 0 : index
    %c0_20 = arith.constant 0 : index
    %c1_21 = arith.constant 1 : index
    %14 = vector.load %arg3[%c0_18, %c0_19, %c0_20, %c1_21] : memref<1x1x4x27xbf16, #tpu.memory_space<vmem>>, vector<1x1x4x22xbf16>
    %15 = vector.shape_cast %14 : vector<1x1x4x22xbf16> to vector<4x22xbf16>
    %c0_22 = arith.constant 0 : index
    %c0_23 = arith.constant 0 : index
    %c0_24 = arith.constant 0 : index
    %c2_25 = arith.constant 2 : index
    %16 = vector.load %arg3[%c0_22, %c0_23, %c0_24, %c2_25] : memref<1x1x4x27xbf16, #tpu.memory_space<vmem>>, vector<1x1x4x22xbf16>
    %17 = vector.shape_cast %16 : vector<1x1x4x22xbf16> to vector<4x22xbf16>
    %c0_26 = arith.constant 0 : index
    %c0_27 = arith.constant 0 : index
    %c0_28 = arith.constant 0 : index
    %c3_29 = arith.constant 3 : index
    %18 = vector.load %arg3[%c0_26, %c0_27, %c0_28, %c3_29] : memref<1x1x4x27xbf16, #tpu.memory_space<vmem>>, vector<1x1x4x22xbf16>
    %19 = vector.shape_cast %18 : vector<1x1x4x22xbf16> to vector<4x22xbf16>
    %c0_30 = arith.constant 0 : index
    %c0_31 = arith.constant 0 : index
    %c0_32 = arith.constant 0 : index
    %c4_33 = arith.constant 4 : index
    %20 = vector.load %arg3[%c0_30, %c0_31, %c0_32, %c4_33] : memref<1x1x4x27xbf16, #tpu.memory_space<vmem>>, vector<1x1x4x22xbf16>
    %21 = vector.shape_cast %20 : vector<1x1x4x22xbf16> to vector<4x22xbf16>
    %c0_34 = arith.constant 0 : index
    %c0_35 = arith.constant 0 : index
    %c0_36 = arith.constant 0 : index
    %c5_37 = arith.constant 5 : index
    %22 = vector.load %arg3[%c0_34, %c0_35, %c0_36, %c5_37] : memref<1x1x4x27xbf16, #tpu.memory_space<vmem>>, vector<1x1x4x22xbf16>
    %23 = vector.shape_cast %22 : vector<1x1x4x22xbf16> to vector<4x22xbf16>
    %24 = tpu.concatenate %6, %7, %8, %9, %10, %11, %13, %15, %17, %19, %21, %23 in 0 : vector<4x22xbf16>, vector<4x22xbf16>, vector<4x22xbf16>, vector<4x22xbf16>, vector<4x22xbf16>, vector<4x22xbf16>, vector<4x22xbf16>, vector<4x22xbf16>, vector<4x22xbf16>, vector<4x22xbf16>, vector<4x22xbf16>, vector<4x22xbf16> -> vector<48x22xbf16>
    %c0_38 = arith.constant 0 : index
    %c0_39 = arith.constant 0 : index
    %25 = vector.load %arg5[%c0_38, %c0_39] : memref<4x48xbf16, #tpu.memory_space<vmem>>, vector<4x48xbf16>
    %cst_40 = arith.constant dense<0.000000e+00> : vector<4x22xf32>
    %26 = tpu.matmul %25, %24, %cst_40 {dimension_numbers = #tpu.dot_dimension_numbers<[1], [0], [0], [1], [0, 0, 1, 1], [], []>} : vector<4x48xbf16>, vector<48x22xbf16>, vector<4x22xf32> -> vector<4x22xf32>
    %c0_41 = arith.constant 0 : index
    %c0_42 = arith.constant 0 : index
    %27 = vector.load %arg9[%c0_41, %c0_42] : memref<4x48xbf16, #tpu.memory_space<vmem>>, vector<4x48xbf16>
    %cst_43 = arith.constant dense<0.000000e+00> : vector<4x22xf32>
    %28 = tpu.matmul %27, %24, %cst_43 {dimension_numbers = #tpu.dot_dimension_numbers<[1], [0], [0], [1], [0, 0, 1, 1], [], []>} : vector<4x48xbf16>, vector<48x22xbf16>, vector<4x22xf32> -> vector<4x22xf32>
    %29 = vector.extract_strided_slice %28 {offsets = [0, 2], sizes = [4, 17], strides = [1, 1]} : vector<4x22xf32> to vector<4x17xf32>
    %c0_44 = arith.constant 0 : index
    %c0_45 = arith.constant 0 : index
    %30 = vector.load %arg6[%c0_44, %c0_45] : memref<4x1xf32, #tpu.memory_space<vmem>>, vector<4x1xf32>
    %31 = vector.broadcast %30 : vector<4x1xf32> to vector<4x22xf32>
    %32 = arith.mulf %26, %31 : vector<4x22xf32>
    %c0_46 = arith.constant 0 : index
    %c0_47 = arith.constant 0 : index
    %33 = vector.load %arg7[%c0_46, %c0_47] : memref<4x1xf32, #tpu.memory_space<vmem>>, vector<4x1xf32>
    %34 = vector.broadcast %33 : vector<4x1xf32> to vector<4x22xf32>
    %35 = arith.addf %32, %34 : vector<4x22xf32>
    %cst_48 = arith.constant 0.000000e+00 : f32
    %36 = vector.broadcast %cst_48 : f32 to vector<4x22xf32>
    %37 = arith.maximumf %35, %36 : vector<4x22xf32>
    %38 = tpu.iota {dimensions = array<i32: 1>} : vector<4x22xi32>
    %c17_i32 = arith.constant 17 : i32
    %39 = arith.muli %arg1, %c17_i32 : i32
    %c2_i32 = arith.constant 2 : i32
    %40 = arith.subi %39, %c2_i32 : i32
    %41 = vector.broadcast %40 : i32 to vector<4x22xi32>
    %42 = arith.addi %38, %41 : vector<4x22xi32>
    %c0_i32 = arith.constant 0 : i32
    %43 = vector.broadcast %c0_i32 : i32 to vector<4x22xi32>
    %44 = arith.cmpi sge, %42, %43 : vector<4x22xi32>
    %c17_i32_49 = arith.constant 17 : i32
    %45 = vector.broadcast %c17_i32_49 : i32 to vector<4x22xi32>
    %46 = arith.cmpi slt, %42, %45 : vector<4x22xi32>
    %47 = arith.andi %44, %46 : vector<4x22xi1>
    %cst_50 = arith.constant 0.000000e+00 : f32
    %48 = vector.broadcast %cst_50 : f32 to vector<4x22xf32>
    %49 = arith.select %47, %37, %48 : vector<4x22xi1>, vector<4x22xf32>
    %50 = arith.truncf %49 : vector<4x22xf32> to vector<4x22xbf16>
    %c0_51 = arith.constant 0 : index
    %c0_52 = arith.constant 0 : index
    %51 = vector.load %arg14[%c0_51, %c0_52] : memref<4x22xbf16, #tpu.memory_space<vmem>>, vector<4x22xbf16>
    tpu.vector_store %arg14[%c0_51, %c0_52], %50 {strides = array<i32>} : memref<4x22xbf16, #tpu.memory_space<vmem>>, vector<4x22xbf16>,
    %c0_53 = arith.constant 0 : index
    %c0_54 = arith.constant 0 : index
    %52 = vector.load %arg14[%c0_53, %c0_54] : memref<4x22xbf16, #tpu.memory_space<vmem>>, vector<4x17xbf16>
    %c0_55 = arith.constant 0 : index
    %c1_56 = arith.constant 1 : index
    %53 = vector.load %arg14[%c0_55, %c1_56] : memref<4x22xbf16, #tpu.memory_space<vmem>>, vector<4x17xbf16>
    %c0_57 = arith.constant 0 : index
    %c2_58 = arith.constant 2 : index
    %54 = vector.load %arg14[%c0_57, %c2_58] : memref<4x22xbf16, #tpu.memory_space<vmem>>, vector<4x17xbf16>
    %c0_59 = arith.constant 0 : index
    %c3_60 = arith.constant 3 : index
    %55 = vector.load %arg14[%c0_59, %c3_60] : memref<4x22xbf16, #tpu.memory_space<vmem>>, vector<4x17xbf16>
    %c0_61 = arith.constant 0 : index
    %c4_62 = arith.constant 4 : index
    %56 = vector.load %arg14[%c0_61, %c4_62] : memref<4x22xbf16, #tpu.memory_space<vmem>>, vector<4x17xbf16>
    %c0_63 = arith.constant 0 : index
    %c5_64 = arith.constant 5 : index
    %57 = vector.load %arg14[%c0_63, %c5_64] : memref<4x22xbf16, #tpu.memory_space<vmem>>, vector<4x17xbf16>
    %58 = tpu.concatenate %52, %53, %54, %55, %56, %57 in 0 : vector<4x17xbf16>, vector<4x17xbf16>, vector<4x17xbf16>, vector<4x17xbf16>, vector<4x17xbf16>, vector<4x17xbf16> -> vector<24x17xbf16>
    %c0_65 = arith.constant 0 : index
    %c0_66 = arith.constant 0 : index
    %59 = vector.load %arg8[%c0_65, %c0_66] : memref<4x24xbf16, #tpu.memory_space<vmem>>, vector<4x24xbf16>
    %cst_67 = arith.constant dense<0.000000e+00> : vector<4x17xf32>
    %60 = tpu.matmul %59, %58, %cst_67 {dimension_numbers = #tpu.dot_dimension_numbers<[1], [0], [0], [1], [0, 0, 1, 1], [], []>} : vector<4x24xbf16>, vector<24x17xbf16>, vector<4x17xf32> -> vector<4x17xf32>
    %61 = arith.addf %29, %60 : vector<4x17xf32>
    %c0_68 = arith.constant 0 : index
    %c0_69 = arith.constant 0 : index
    %62 = vector.load %arg10[%c0_68, %c0_69] : memref<4x1xf32, #tpu.memory_space<vmem>>, vector<4x1xf32>
    %63 = vector.broadcast %62 : vector<4x1xf32> to vector<4x17xf32>
    %64 = arith.mulf %61, %63 : vector<4x17xf32>
    %c0_70 = arith.constant 0 : index
    %c0_71 = arith.constant 0 : index
    %65 = vector.load %arg11[%c0_70, %c0_71] : memref<4x1xf32, #tpu.memory_space<vmem>>, vector<4x1xf32>
    %66 = vector.broadcast %65 : vector<4x1xf32> to vector<4x17xf32>
    %67 = arith.addf %64, %66 : vector<4x17xf32>
    %cst_72 = arith.constant 0.000000e+00 : f32
    %68 = vector.broadcast %cst_72 : f32 to vector<4x17xf32>
    %69 = arith.maximumf %67, %68 : vector<4x17xf32>
    %70 = arith.truncf %69 : vector<4x17xf32> to vector<4x17xbf16>
    %c0_73 = arith.constant 0 : index
    %c0_74 = arith.constant 0 : index
    %c0_75 = arith.constant 0 : index
    %71 = vector.load %arg12[%c0_73, %c0_74, %c0_75] : memref<1x4x17xbf16, #tpu.memory_space<vmem>>, vector<1x4x17xbf16>
    %72 = vector.shape_cast %71 : vector<1x4x17xbf16> to vector<4x17xbf16>
    %73 = vector.shape_cast %70 : vector<4x17xbf16> to vector<1x4x17xbf16>
    tpu.vector_store %arg12[%c0_73, %c0_74, %c0_75], %73 {strides = array<i32>} : memref<1x4x17xbf16, #tpu.memory_space<vmem>>, vector<1x4x17xbf16>,
    return
  }
  func.func @transform_0(%arg0: i32, %arg1: i32) -> (i32, i32, i32, i32) {
    %c0_i32 = arith.constant 0 : i32
    %c0_i32_0 = arith.constant 0 : i32
    %c0_i32_1 = arith.constant 0 : i32
    return %arg0, %arg1, %c0_i32, %c0_i32_0 : i32, i32, i32, i32
  }
  func.func @transform_1(%arg0: i32, %arg1: i32) -> (i32, i32, i32, i32) {
    %c0_i32 = arith.constant 0 : i32
    %c0_i32_0 = arith.constant 0 : i32
    %c0_i32_1 = arith.constant 0 : i32
    return %arg0, %arg1, %c0_i32, %c0_i32_0 : i32, i32, i32, i32
  }
  func.func @transform_2(%arg0: i32, %arg1: i32) -> (i32, i32) {
    %c0_i32 = arith.constant 0 : i32
    %c0_i32_0 = arith.constant 0 : i32
    %c0_i32_1 = arith.constant 0 : i32
    return %c0_i32, %c0_i32_0 : i32, i32
  }
  func.func @transform_3(%arg0: i32, %arg1: i32) -> (i32, i32) {
    %c0_i32 = arith.constant 0 : i32
    %c0_i32_0 = arith.constant 0 : i32
    %c0_i32_1 = arith.constant 0 : i32
    return %c0_i32, %c0_i32_0 : i32, i32
  }
  func.func @transform_4(%arg0: i32, %arg1: i32) -> (i32, i32) {
    %c0_i32 = arith.constant 0 : i32
    %c0_i32_0 = arith.constant 0 : i32
    %c0_i32_1 = arith.constant 0 : i32
    return %c0_i32, %c0_i32_0 : i32, i32
  }
  func.func @transform_5(%arg0: i32, %arg1: i32) -> (i32, i32) {
    %c0_i32 = arith.constant 0 : i32
    %c0_i32_0 = arith.constant 0 : i32
    %c0_i32_1 = arith.constant 0 : i32
    return %c0_i32, %c0_i32_0 : i32, i32
  }
  func.func @transform_6(%arg0: i32, %arg1: i32) -> (i32, i32) {
    %c0_i32 = arith.constant 0 : i32
    %c0_i32_0 = arith.constant 0 : i32
    %c0_i32_1 = arith.constant 0 : i32
    return %c0_i32, %c0_i32_0 : i32, i32
  }
  func.func @transform_7(%arg0: i32, %arg1: i32) -> (i32, i32) {
    %c0_i32 = arith.constant 0 : i32
    %c0_i32_0 = arith.constant 0 : i32
    %c0_i32_1 = arith.constant 0 : i32
    return %c0_i32, %c0_i32_0 : i32, i32
  }
  func.func @transform_8(%arg0: i32, %arg1: i32) -> (i32, i32) {
    %c0_i32 = arith.constant 0 : i32
    %c0_i32_0 = arith.constant 0 : i32
    %c0_i32_1 = arith.constant 0 : i32
    return %c0_i32, %c0_i32_0 : i32, i32
  }
  func.func @transform_9(%arg0: i32, %arg1: i32) -> (i32, i32) {
    %c0_i32 = arith.constant 0 : i32
    %c0_i32_0 = arith.constant 0 : i32
    %c0_i32_1 = arith.constant 0 : i32
    return %c0_i32, %c0_i32_0 : i32, i32
  }
  func.func @transform_10(%arg0: i32, %arg1: i32) -> (i32, i32, i32) {
    %c0_i32 = arith.constant 0 : i32
    %c0_i32_0 = arith.constant 0 : i32
    return %arg0, %c0_i32, %arg1 : i32, i32, i32
  }
}

</mosaic_0001>

<llo_original>
// kernel: decoder_block_pallas.1
$region0: #{decoder_block_pallas.1}
  #allocation0 [shape = 'u32[]', space=smem, size = 0x4, offset = 0x4, fixed_abs, tag = 'smem constant byte address 0x4 - core index']
  #allocation1 [shape = 'u32[144,128]{1,0:T(1,128)}', space=vmem, size = 0x12000, scoped, tag = 'internal scratch']
  #allocation2 [shape = 'bf16[4,27]{1,0:T(4,128)(2,1)}', space=vmem, size = 0x400, scoped, tag = 'scratch operand']
  #allocation3 [shape = 'bf16[4,22]{1,0:T(4,128)(2,1)}', space=vmem, size = 0x400, scoped, tag = 'scratch operand']
  %s0 = inlined_call_operand.vmem [shape: bf16[2,1,17,27], index: 0, kind: input, shape index: {}]
  %s1 = inlined_call_operand.vmem [shape: bf16[2,1,4,27], index: 1, kind: input, shape index: {}]
  %s2 = inlined_call_operand.vmem [shape: bf16[4,17], index: 2, kind: input, shape index: {}]
  %s3 = inlined_call_operand.vmem [shape: bf16[4,48], index: 3, kind: input, shape index: {}]
  %s4 = inlined_call_operand.vmem [shape: f32[4,1], index: 4, kind: input, shape index: {}]
  %s5 = inlined_call_operand.vmem [shape: f32[4,1], index: 5, kind: input, shape index: {}]
  %s6 = inlined_call_operand.vmem [shape: bf16[4,24], index: 6, kind: input, shape index: {}]
  %s7 = inlined_call_operand.vmem [shape: bf16[4,48], index: 7, kind: input, shape index: {}]
  %s8 = inlined_call_operand.vmem [shape: f32[4,1], index: 8, kind: input, shape index: {}]
  %s9 = inlined_call_operand.vmem [shape: f32[4,1], index: 9, kind: input, shape index: {}]
  %s10 = inlined_call_operand.hbm [shape: bf16[2,4,17], index: 10, kind: output, shape index: {}]
  %s11 = sld [smem:[#allocation0]]
  $region73: #{decoder_block_pallas.1} parent=0
    _
  %s13 = ssub.s32 1, %s11
  %s14 = scalar_select 0, %s13, %s11
  $region1: #{decoder_block_pallas.1} parent=0
    #allocation4 [shape = 'u8[2048]{0}', space=vmem, size = 0x800, scoped, tag = 'output window, operand 0']
    #allocation5 [shape = 's32[2]{0}', space=sflag, size = 0x8, scoped, tag = 'scoped memory for decoder_block_pallas.1']
    %15 = vsyncpa [#allocation5], 0
    %s16 = scalar_lea.sflag [#allocation5], 1
    %17 = vsyncpa %s16, 0
    loop: start=0, step=1, limit=4
    $region2: #{decoder_block_pallas.1} parent=1 // loop_pre_header
      _
    $region3: #{decoder_block_pallas.1} parent=1 // loop_header
      %s19 = sphi 0, %s23
      %p20 = scmp.ge.s32.totalorder %s19, 4
      %s26 = sphi 0, %s38
      %s27 = sphi 0, %s34
      %s28 = sphi 0, %s26
      %s29 = sphi 0, %s27
      %s30 = sphi 0, %s28
      %s31 = sphi 0, %s29
      %s43 = sphi 0, %s45
      %s46 = sphi 0, %s43
      %s47 = sphi 0, %s46
      %s63 = sphi 0, %s47
      %s71 = sphi 0, %s73
      %s74 = sphi 0, %s71
      %s75 = sphi 0, %s74
      %s91 = sphi 0, %s75
      %s95 = sphi 0, %s95
      %s97 = sphi 0, %s95
      %s98 = sphi 0, %s97
      %s112 = sphi 0, %s98
      %s116 = sphi 0, %s116
      %s118 = sphi 0, %s116
      %s119 = sphi 0, %s118
      %s133 = sphi 0, %s119
      %s137 = sphi 0, %s137
      %s139 = sphi 0, %s137
      %s140 = sphi 0, %s139
      %s154 = sphi 0, %s140
      %s158 = sphi 0, %s158
      %s160 = sphi 0, %s158
      %s161 = sphi 0, %s160
      %s175 = sphi 0, %s161
      %s179 = sphi 0, %s179
      %s181 = sphi 0, %s179
      %s182 = sphi 0, %s181
      %s196 = sphi 0, %s182
      %s200 = sphi 0, %s200
      %s202 = sphi 0, %s200
      %s203 = sphi 0, %s202
      %s217 = sphi 0, %s203
      %s221 = sphi 0, %s221
      %s223 = sphi 0, %s221
      %s224 = sphi 0, %s223
      %s238 = sphi 0, %s224
      %s242 = sphi 0, %s242
      %s244 = sphi 0, %s242
      %s245 = sphi 0, %s244
      %s259 = sphi 0, %s245
      %s267 = sphi 0, %s269
      %s270 = sphi 0, %s267
      %s271 = sphi 0, %s270
      %s287 = sphi 0, %s271
    $region4: #{decoder_block_pallas.1} parent=1 // loop_header_branch
      %22 = sbr.rel (%p20) target = $region8
    $region5: #{decoder_block_pallas.1} parent=1 // loop_body
      %s24 = ssub.s32 %s19, 1
      %s25 = ssub.s32 %s19, 2
      %s32 = sadd.s32 1, %s27
      %p33 = scmp.ge.s32.totalorder %s32, 1
      %s34 = scalar_select %p33, 0, %s32
      %s35 = sadd.s32 1, %s26
      %s36 = scalar_select %p33, %s35, %s26
      %p37 = scmp.ge.s32.totalorder %s36, 2
      %s38 = scalar_select %p37, 0, %s36
      %s39 = ssub.s32 %s26, %s38
      %s40 = ssub.s32 %s27, %s34
      %s41 = sor.u32 %s39, %s40
      %p42 = scmp.eq.s32.totalorder %s41, 0
      %s44 = sadd.s32 %s43, 1
      %s45 = scalar_select %p42, %s43, %s44
      %p48 = pneg %p42
      %p49 = scmp.eq.s32.totalorder %s19, 1
      %p50 = por %p48, %p49
      %p51 = scmp.ne.s32.totalorder %s43, %s46
      %p52 = scmp.eq.s32.totalorder %s19, 0
      %p53 = por %p51, %p52
      %p54 = scmp.ne.s32.totalorder %s43, %s46
      %p55 = scmp.eq.s32.totalorder %s24, 1
      %p56 = por %p54, %p55
      %p57 = scmp.ne.s32.totalorder %s46, %s47
      %p58 = scmp.eq.s32.totalorder %s24, 0
      %p59 = por %p57, %p58
      %p60 = scmp.ne.s32.totalorder %s46, %s47
      %p61 = scmp.eq.s32.totalorder %s25, 1
      %p62 = por %p60, %p61
      %p64 = scmp.ne.s32.totalorder %s47, %s63
      %p65 = scmp.eq.s32.totalorder %s25, 0
      %p66 = por %p64, %p65
      %s67 = ssub.s32 %s26, %s38
      %s68 = ssub.s32 %s27, %s34
      %s69 = sor.u32 %s67, %s68
      %p70 = scmp.eq.s32.totalorder %s69, 0
      %s72 = sadd.s32 %s71, 1
      %s73 = scalar_select %p70, %s71, %s72
      %p76 = pneg %p70
      %p77 = scmp.eq.s32.totalorder %s19, 1
      %p78 = por %p76, %p77
      %p79 = scmp.ne.s32.totalorder %s71, %s74
      %p80 = scmp.eq.s32.totalorder %s19, 0
      %p81 = por %p79, %p80
      %p82 = scmp.ne.s32.totalorder %s71, %s74
      %p83 = scmp.eq.s32.totalorder %s24, 1
      %p84 = por %p82, %p83
      %p85 = scmp.ne.s32.totalorder %s74, %s75
      %p86 = scmp.eq.s32.totalorder %s24, 0
      %p87 = por %p85, %p86
      %p88 = scmp.ne.s32.totalorder %s74, %s75
      %p89 = scmp.eq.s32.totalorder %s25, 1
      %p90 = por %p88, %p89
      %p92 = scmp.ne.s32.totalorder %s75, %s91
      %p93 = scmp.eq.s32.totalorder %s25, 0
      %p94 = por %p92, %p93
      %s96 = sadd.s32 %s95, 1
      %p99 = scmp.eq.s32.totalorder %s19, 1
      %p100 = scmp.ne.s32.totalorder %s95, %s97
      %p101 = scmp.eq.s32.totalorder %s19, 0
      %p102 = por %p100, %p101
      %p103 = scmp.ne.s32.totalorder %s95, %s97
      %p104 = scmp.eq.s32.totalorder %s24, 1
      %p105 = por %p103, %p104
      %p106 = scmp.ne.s32.totalorder %s97, %s98
      %p107 = scmp.eq.s32.totalorder %s24, 0
      %p108 = por %p106, %p107
      %p109 = scmp.ne.s32.totalorder %s97, %s98
      %p110 = scmp.eq.s32.totalorder %s25, 1
      %p111 = por %p109, %p110
      %p113 = scmp.ne.s32.totalorder %s98, %s112
      %p114 = scmp.eq.s32.totalorder %s25, 0
      %p115 = por %p113, %p114
      %s117 = sadd.s32 %s116, 1
      %p120 = scmp.eq.s32.totalorder %s19, 1
      %p121 = scmp.ne.s32.totalorder %s116, %s118
      %p122 = scmp.eq.s32.totalorder %s19, 0
      %p123 = por %p121, %p122
      %p124 = scmp.ne.s32.totalorder %s116, %s118
      %p125 = scmp.eq.s32.totalorder %s24, 1
      %p126 = por %p124, %p125
      %p127 = scmp.ne.s32.totalorder %s118, %s119
      %p128 = scmp.eq.s32.totalorder %s24, 0
      %p129 = por %p127, %p128
      %p130 = scmp.ne.s32.totalorder %s118, %s119
      %p131 = scmp.eq.s32.totalorder %s25, 1
      %p132 = por %p130, %p131
      %p134 = scmp.ne.s32.totalorder %s119, %s133
      %p135 = scmp.eq.s32.totalorder %s25, 0
      %p136 = por %p134, %p135
      %s138 = sadd.s32 %s137, 1
      %p141 = scmp.eq.s32.totalorder %s19, 1
      %p142 = scmp.ne.s32.totalorder %s137, %s139
      %p143 = scmp.eq.s32.totalorder %s19, 0
      %p144 = por %p142, %p143
      %p145 = scmp.ne.s32.totalorder %s137, %s139
      %p146 = scmp.eq.s32.totalorder %s24, 1
      %p147 = por %p145, %p146
      %p148 = scmp.ne.s32.totalorder %s139, %s140
      %p149 = scmp.eq.s32.totalorder %s24, 0
      %p150 = por %p148, %p149
      %p151 = scmp.ne.s32.totalorder %s139, %s140
      %p152 = scmp.eq.s32.totalorder %s25, 1
      %p153 = por %p151, %p152
      %p155 = scmp.ne.s32.totalorder %s140, %s154
      %p156 = scmp.eq.s32.totalorder %s25, 0
      %p157 = por %p155, %p156
      %s159 = sadd.s32 %s158, 1
      %p162 = scmp.eq.s32.totalorder %s19, 1
      %p163 = scmp.ne.s32.totalorder %s158, %s160
      %p164 = scmp.eq.s32.totalorder %s19, 0
      %p165 = por %p163, %p164
      %p166 = scmp.ne.s32.totalorder %s158, %s160
      %p167 = scmp.eq.s32.totalorder %s24, 1
      %p168 = por %p166, %p167
      %p169 = scmp.ne.s32.totalorder %s160, %s161
      %p170 = scmp.eq.s32.totalorder %s24, 0
      %p171 = por %p169, %p170
      %p172 = scmp.ne.s32.totalorder %s160, %s161
      %p173 = scmp.eq.s32.totalorder %s25, 1
      %p174 = por %p172, %p173
      %p176 = scmp.ne.s32.totalorder %s161, %s175
      %p177 = scmp.eq.s32.totalorder %s25, 0
      %p178 = por %p176, %p177
      %s180 = sadd.s32 %s179, 1
      %p183 = scmp.eq.s32.totalorder %s19, 1
      %p184 = scmp.ne.s32.totalorder %s179, %s181
      %p185 = scmp.eq.s32.totalorder %s19, 0
      %p186 = por %p184, %p185
      %p187 = scmp.ne.s32.totalorder %s179, %s181
      %p188 = scmp.eq.s32.totalorder %s24, 1
      %p189 = por %p187, %p188
      %p190 = scmp.ne.s32.totalorder %s181, %s182
      %p191 = scmp.eq.s32.totalorder %s24, 0
      %p192 = por %p190, %p191
      %p193 = scmp.ne.s32.totalorder %s181, %s182
      %p194 = scmp.eq.s32.totalorder %s25, 1
      %p195 = por %p193, %p194
      %p197 = scmp.ne.s32.totalorder %s182, %s196
      %p198 = scmp.eq.s32.totalorder %s25, 0
      %p199 = por %p197, %p198
      %s201 = sadd.s32 %s200, 1
      %p204 = scmp.eq.s32.totalorder %s19, 1
      %p205 = scmp.ne.s32.totalorder %s200, %s202
      %p206 = scmp.eq.s32.totalorder %s19, 0
      %p207 = por %p205, %p206
      %p208 = scmp.ne.s32.totalorder %s200, %s202
      %p209 = scmp.eq.s32.totalorder %s24, 1
      %p210 = por %p208, %p209
      %p211 = scmp.ne.s32.totalorder %s202, %s203
      %p212 = scmp.eq.s32.totalorder %s24, 0
      %p213 = por %p211, %p212
      %p214 = scmp.ne.s32.totalorder %s202, %s203
      %p215 = scmp.eq.s32.totalorder %s25, 1
      %p216 = por %p214, %p215
      %p218 = scmp.ne.s32.totalorder %s203, %s217
      %p219 = scmp.eq.s32.totalorder %s25, 0
      %p220 = por %p218, %p219
      %s222 = sadd.s32 %s221, 1
      %p225 = scmp.eq.s32.totalorder %s19, 1
      %p226 = scmp.ne.s32.totalorder %s221, %s223
      %p227 = scmp.eq.s32.totalorder %s19, 0
      %p228 = por %p226, %p227
      %p229 = scmp.ne.s32.totalorder %s221, %s223
      %p230 = scmp.eq.s32.totalorder %s24, 1
      %p231 = por %p229, %p230
      %p232 = scmp.ne.s32.totalorder %s223, %s224
      %p233 = scmp.eq.s32.totalorder %s24, 0
      %p234 = por %p232, %p233
      %p235 = scmp.ne.s32.totalorder %s223, %s224
      %p236 = scmp.eq.s32.totalorder %s25, 1
      %p237 = por %p235, %p236
      %p239 = scmp.ne.s32.totalorder %s224, %s238
      %p240 = scmp.eq.s32.totalorder %s25, 0
      %p241 = por %p239, %p240
      %s243 = sadd.s32 %s242, 1
      %p246 = scmp.eq.s32.totalorder %s19, 1
      %p247 = scmp.ne.s32.totalorder %s242, %s244
      %p248 = scmp.eq.s32.totalorder %s19, 0
      %p249 = por %p247, %p248
      %p250 = scmp.ne.s32.totalorder %s242, %s244
      %p251 = scmp.eq.s32.totalorder %s24, 1
      %p252 = por %p250, %p251
      %p253 = scmp.ne.s32.totalorder %s244, %s245
      %p254 = scmp.eq.s32.totalorder %s24, 0
      %p255 = por %p253, %p254
      %p256 = scmp.ne.s32.totalorder %s244, %s245
      %p257 = scmp.eq.s32.totalorder %s25, 1
      %p258 = por %p256, %p257
      %p260 = scmp.ne.s32.totalorder %s245, %s259
      %p261 = scmp.eq.s32.totalorder %s25, 0
      %p262 = por %p260, %p261
      %s263 = ssub.s32 %s26, %s38
      %s264 = ssub.s32 %s27, %s34
      %s265 = sor.u32 %s263, %s264
      %p266 = scmp.eq.s32.totalorder %s265, 0
      %s268 = sadd.s32 %s267, 1
      %s269 = scalar_select %p266, %s267, %s268
      %p272 = pneg %p266
      %p273 = scmp.eq.s32.totalorder %s19, 1
      %p274 = por %p272, %p273
      %p275 = scmp.ne.s32.totalorder %s267, %s270
      %p276 = scmp.eq.s32.totalorder %s19, 0
      %p277 = por %p275, %p276
      %p278 = scmp.ne.s32.totalorder %s267, %s270
      %p279 = scmp.eq.s32.totalorder %s24, 1
      %p280 = por %p278, %p279
      %p281 = scmp.ne.s32.totalorder %s270, %s271
      %p282 = scmp.eq.s32.totalorder %s24, 0
      %p283 = por %p281, %p282
      %p284 = scmp.ne.s32.totalorder %s270, %s271
      %p285 = scmp.eq.s32.totalorder %s25, 1
      %p286 = por %p284, %p285
      %p288 = scmp.ne.s32.totalorder %s271, %s287
      %p289 = scmp.eq.s32.totalorder %s25, 0
      %p290 = por %p288, %p289
      %p291 = scmp.le.s32.totalorder 1, %s19
      %p292 = scmp.lt.s32.totalorder %s19, 3
      %p293 = pnand %p291, %p292
      %p294 = pneg %p293
      // Predicated region
      $region9: #{decoder_block_pallas.1} parent=5 // pred_check
        _
      $region10: #{decoder_block_pallas.1} parent=5 // pred_check_branch
        %296 = sbr.rel (%p293) target = $region12
      $region11: #{decoder_block_pallas.1} parent=5 // pred_region
        %s297 = ssub.s32 %s19, 1
        // Predicated region
        $region13: #{decoder_block_pallas.1} parent=11 // pred_check
          %p298 = pneg %p108
        $region14: #{decoder_block_pallas.1} parent=11 // pred_check_branch
          %300 = sbr.rel (%p298) target = $region16
        $region15: #{decoder_block_pallas.1} parent=11 // pred_region
          _
        $region16: #{decoder_block_pallas.1} parent=11 // pred_fallthru
          _
        // Predicated region
        $region17: #{decoder_block_pallas.1} parent=11 // pred_check
          %p301 = pneg %p129
        $region18: #{decoder_block_pallas.1} parent=11 // pred_check_branch
          %303 = sbr.rel (%p301) target = $region20
        $region19: #{decoder_block_pallas.1} parent=11 // pred_region
          _
        $region20: #{decoder_block_pallas.1} parent=11 // pred_fallthru
          _
        // Predicated region
        $region21: #{decoder_block_pallas.1} parent=11 // pred_check
          %p304 = pneg %p150
        $region22: #{decoder_block_pallas.1} parent=11 // pred_check_branch
          %306 = sbr.rel (%p304) target = $region24
        $region23: #{decoder_block_pallas.1} parent=11 // pred_region
          _
        $region24: #{decoder_block_pallas.1} parent=11 // pred_fallthru
          _
        // Predicated region
        $region25: #{decoder_block_pallas.1} parent=11 // pred_check
          %p307 = pneg %p171
        $region26: #{decoder_block_pallas.1} parent=11 // pred_check_branch
          %309 = sbr.rel (%p307) target = $region28
        $region27: #{decoder_block_pallas.1} parent=11 // pred_region
          _
        $region28: #{decoder_block_pallas.1} parent=11 // pred_fallthru
          _
        // Predicated region
        $region29: #{decoder_block_pallas.1} parent=11 // pred_check
          %p310 = pneg %p192
        $region30: #{decoder_block_pallas.1} parent=11 // pred_check_branch
          %312 = sbr.rel (%p310) target = $region32
        $region31: #{decoder_block_pallas.1} parent=11 // pred_region
          _
        $region32: #{decoder_block_pallas.1} parent=11 // pred_fallthru
          _
        // Predicated region
        $region33: #{decoder_block_pallas.1} parent=11 // pred_check
          %p313 = pneg %p213
        $region34: #{decoder_block_pallas.1} parent=11 // pred_check_branch
          %315 = sbr.rel (%p313) target = $region36
        $region35: #{decoder_block_pallas.1} parent=11 // pred_region
          _
        $region36: #{decoder_block_pallas.1} parent=11 // pred_fallthru
          _
        // Predicated region
        $region37: #{decoder_block_pallas.1} parent=11 // pred_check
          %p316 = pneg %p234
        $region38: #{decoder_block_pallas.1} parent=11 // pred_check_branch
          %318 = sbr.rel (%p316) target = $region40
        $region39: #{decoder_block_pallas.1} parent=11 // pred_region
          _
        $region40: #{decoder_block_pallas.1} parent=11 // pred_fallthru
          _
        // Predicated region
        $region41: #{decoder_block_pallas.1} parent=11 // pred_check
          %p319 = pneg %p255
        $region42: #{decoder_block_pallas.1} parent=11 // pred_check_branch
          %321 = sbr.rel (%p319) target = $region44
        $region43: #{decoder_block_pallas.1} parent=11 // pred_region
          _
        $region44: #{decoder_block_pallas.1} parent=11 // pred_fallthru
          _
      $region12: #{decoder_block_pallas.1} parent=5 // pred_fallthru
        _
      %p322 = scmp.lt.s32.totalorder %s19, 2
      // Predicated region
      $region45: #{decoder_block_pallas.1} parent=5 // pred_check
        %p323 = pneg %p322
      $region46: #{decoder_block_pallas.1} parent=5 // pred_check_branch
        %325 = sbr.rel (%p323) target = $region48
      $region47: #{decoder_block_pallas.1} parent=5 // pred_region
        // Predicated region
        $region49: #{decoder_block_pallas.1} parent=47 // pred_check
          %p326 = pneg %p53
        $region50: #{decoder_block_pallas.1} parent=47 // pred_check_branch
          %328 = sbr.rel (%p326) target = $region52
        $region51: #{decoder_block_pallas.1} parent=47 // pred_region
          %p329 = scmp.lt.s32.totalorder %s26, 1
          %s330 = scalar_select %p329, %s26, 1
          %p331 = scmp.lt.s32.totalorder %s27, 0
          %s332 = scalar_select %p331, %s27, 0
          %s333 = smul.addr %s332, 3
          %s334 = smul.addr %s330, 3
          %s335 = sadd.s32 %s333, %s334
          %s336 = smul.addr %s335, 4
          %s337 = scalar_lea.vmem %s0, %s336
        $region52: #{decoder_block_pallas.1} parent=47 // pred_fallthru
          _
        // Predicated region
        $region53: #{decoder_block_pallas.1} parent=47 // pred_check
          %p338 = pneg %p81
        $region54: #{decoder_block_pallas.1} parent=47 // pred_check_branch
          %340 = sbr.rel (%p338) target = $region56
        $region55: #{decoder_block_pallas.1} parent=47 // pred_region
          %p341 = scmp.lt.s32.totalorder %s26, 1
          %s342 = scalar_select %p341, %s26, 1
          %p343 = scmp.lt.s32.totalorder %s27, 0
          %s344 = scalar_select %p343, %s27, 0
          %s345 = sadd.s32 %s344, %s342
          %s346 = smul.addr %s345, 2
          %s347 = scalar_lea.vmem %s1, %s346
        $region56: #{decoder_block_pallas.1} parent=47 // pred_fallthru
          _
      $region48: #{decoder_block_pallas.1} parent=5 // pred_fallthru
        _
      %p348 = scmp.le.s32.totalorder 1, %s19
      %p349 = scmp.lt.s32.totalorder %s19, 3
      %p350 = pnand %p348, %p349
      %p351 = pneg %p350
      // Predicated region
      $region57: #{decoder_block_pallas.1} parent=5 // pred_check
        _
      $region58: #{decoder_block_pallas.1} parent=5 // pred_check_branch
        %353 = sbr.rel (%p350) target = $region60
      $region59: #{decoder_block_pallas.1} parent=5 // pred_region
        %s354 = ssub.s32 %s19, 1
        %p355 = scmp.lt.s32.totalorder %s28, 1
        %s356 = scalar_select %p355, %s28, 1
        %p357 = scmp.lt.s32.totalorder %s29, 0
        %s358 = scalar_select %p357, %s29, 0
        %s359 = smul.addr %s358, 3
        %s360 = smul.addr %s356, 3
        %s361 = sadd.s32 %s359, %s360
        %s362 = smul.addr %s361, 4
        %s363 = scalar_lea.vmem %s0, %s362
        %p364 = pneg %p59
        %p365 = pneg %p56
        %p366 = scmp.lt.s32.totalorder %s28, 1
        %s367 = scalar_select %p366, %s28, 1
        %p368 = scmp.lt.s32.totalorder %s29, 0
        %s369 = scalar_select %p368, %s29, 0
        %s370 = sadd.s32 %s369, %s367
        %s371 = smul.addr %s370, 2
        %s372 = scalar_lea.vmem %s1, %s371
        %p373 = pneg %p87
        %p374 = pneg %p84
        %p375 = pneg %p108
        %p376 = pneg %p105
        %p377 = pneg %p129
        %p378 = pneg %p126
        %p379 = pneg %p150
        %p380 = pneg %p147
        %p381 = pneg %p171
        %p382 = pneg %p168
        %p383 = pneg %p192
        %p384 = pneg %p189
        %p385 = pneg %p213
        %p386 = pneg %p210
        %p387 = pneg %p234
        %p388 = pneg %p231
        %p389 = pneg %p255
        %p390 = pneg %p252
        %p391 = pneg %p283
        %p392 = pneg %p280
        %s393 = sand.u32 %s270, 1
        %s394 = scalar_lea.sflag [#allocation5], %s393
        %s395 = sand.u32 %s270, 1
        %s396 = smul.addr %s395, 2
        %s397 = scalar_lea.vmem [#allocation4], %s396
        %p398 = scmp.lt.s32.totalorder %s28, 1
        %s399 = scalar_select %p398, %s28, 1
        %p400 = scmp.lt.s32.totalorder %s29, 0
        %s401 = scalar_select %p400, %s29, 0
        %s402 = smul.addr %s401, 3
        %s403 = smul.addr %s399, 3
        %s404 = sadd.s32 %s402, %s403
        %s405 = smul.addr %s404, 4
        %s406 = scalar_lea.vmem %s0, %s405
        %p407 = scmp.lt.s32.totalorder %s28, 1
        %s408 = scalar_select %p407, %s28, 1
        %p409 = scmp.lt.s32.totalorder %s29, 0
        %s410 = scalar_select %p409, %s29, 0
        %s411 = sadd.s32 %s410, %s408
        %s412 = smul.addr %s411, 2
        %s413 = scalar_lea.vmem %s1, %s412
        %v415 = vld [vmem:[%s2] sm:$0x3]
        %v416 = vld [vmem:[%s406] sm:$0xf]
        %v417 = vld [vmem:[%s406 + $0x4] sm:$0xf]
        %v418 = vld [vmem:[%s406 + $0x8] sm:$0x1]
        %v422 = vunpack.c.l.b16 %v416
        %v423 = vunpack.c.l.b16 %v417
        %v424 = vunpack.c.l.b16 %v418
        %v425 = vpack.c.b16 %v423, %v422
        %v426 = vpack.c.b16 %v424, %v424
        %vm428 = vcmask 138240
        %v430 = vsel %vm428, %v415, 0
        %vm432 = vcmask 1040384
        %v433 = vsel 0, 4294967295, 65535
        %v434 = vsel %vm432, %v433, 0
        %v436 = vand.u32 %v426, %v434
        %438 = vmatprep.subr.bf16.mxu0 0
        %439 = vmatpush1.bf16.msra.mxu0 %v425
        %440 = vmatprep.subr.bf16.mxu0 0
        %441 = vmatpush1.bf16.msra.mxu0 %v436
        %442 = vmatprep.subr.bf16.mxu0 0
        %443 = vmatpush1.bf16.msra.mxu0 0
        %444 = vmatprep.subr.bf16.mxu0 0
        %445 = vmatpush1.bf16.msra.mxu0 0
        %446 = vmatprep.subr.bf16.mxu0 0
        %447 = vmatpush1.bf16.msra.mxu0 0
        %448 = vmatprep.subr.bf16.mxu0 0
        %449 = vmatpush1.bf16.msra.mxu0 0
        %450 = vmatprep.subr.bf16.mxu0 0
        %451 = vmatpush1.bf16.msra.mxu0 0
        %452 = vmatprep.subr.bf16.mxu0 0
        %453 = vmatpush1.bf16.msra.mxu0 0
        %454 = vmatprep.subr.bf16.mxu0 0
        %455 = vmatpush1.bf16.msra.mxu0 0
        %456 = vmatprep.subr.bf16.mxu0 0
        %457 = vmatpush1.bf16.msra.mxu0 0
        %458 = vmatprep.subr.bf16.mxu0 0
        %459 = vmatpush1.bf16.msra.mxu0 0
        %460 = vmatprep.subr.bf16.mxu0 0
        %461 = vmatpush1.bf16.msra.mxu0 0
        %462 = vmatprep.subr.bf16.mxu0 0
        %463 = vmatpush1.bf16.msra.mxu0 0
        %464 = vmatprep.subr.bf16.mxu0 0
        %465 = vmatpush1.bf16.msra.mxu0 0
        %466 = vmatprep.subr.bf16.mxu0 0
        %467 = vmatpush1.bf16.msra.mxu0 0
        %468 = vmatprep.subr.bf16.mxu0 0
        %469 = vmatpush1.bf16.msra.mxu0 0
        %470 = vmatprep.mubr.bf16.mxu0 0
        %471 = vmatmul.mubr.bf16.gmra.mrb[0].mxu0 %v430
        %v472 = vpop.f32.mrb[0].mxu0
        %v473 = vadd.f32 0.0, %v472
        %v474 = vpop.f32.mrb[0].mxu0
        %v475 = vpop.f32.mrb[0].mxu0
        %v476 = vpop.f32.mrb[0].mxu0
        %477 = vdwg.mxu0
        %v478 = vpack.c.bf16 %v473, %v473
        %vm479 = vcmask 214016
        %480 = vst.msk [vmem:[#allocation2] sm:$0x3] %vm479, %v478
        %v481 = vld [vmem:[#allocation2] sm:$0x3]
        %v482 = vld [vmem:[%s413] sm:$0x3]
        %v484 = vcombine.low %v481, %v481
        %v486 = vunpack.c.l.s4 1983009808
        %v487 = vunpack.c.0.s8 %v486
        %v488 = vlaneseq
        %v489 = vshrl.u32 %v488, 7
        %v490 = vsub.s32 %v487, %v489
        %v491 = vrot.slane %v484, %v490
        %v493 = vunpack.c.l.s4 1983009808
        %v494 = vunpack.c.0.s8 %v493
        %v495 = vlaneseq
        %v496 = vshrl.u32 %v495, 7
        %v497 = vsub.s32 %v494, %v496
        %v498 = vrot.slane %v481, %v497
        %499 = vrot.lane.b32.xlu0 %v491, 127
        %v500 = vpop.permute.xlu0 %499
        %v501 = vcombine.low %v498, %v498
        %502 = vrot.lane.b32.xlu0 %v501, 126
        %v503 = vpop.permute.xlu0 %502
        %v504 = vcombine.low %v491, %v491
        %505 = vrot.lane.b32.xlu0 %v504, 125
        %v506 = vpop.permute.xlu0 %505
        %507 = vrot.lane.b32.xlu0 %v498, 124
        %v508 = vpop.permute.xlu0 %507
        %509 = vrot.lane.b32.xlu0 %v491, 123
        %v510 = vpop.permute.xlu0 %509
        %v513 = vunpack.c.l.s4 1983009808
        %v514 = vunpack.c.0.s8 %v513
        %v515 = vlaneseq
        %v516 = vshrl.u32 %v515, 7
        %v517 = vsub.s32 %v514, %v516
        %v518 = vrot.slane %v482, %v517
        %v519 = vcombine.low %v518, %v518
        %v520 = vcombine.low %v482, %v482
        %v522 = vunpack.c.l.s4 1983009808
        %v523 = vunpack.c.0.s8 %v522
        %v524 = vlaneseq
        %v525 = vshrl.u32 %v524, 7
        %v526 = vsub.s32 %v523, %v525
        %v527 = vrot.slane %v520, %v526
        %v528 = vcombine.low %v527, %v527
        %529 = vrot.lane.b32.xlu0 %v528, 127
        %v530 = vpop.permute.xlu0 %529
        %531 = vrot.lane.b32.xlu0 %v518, 126
        %v532 = vpop.permute.xlu0 %531
        %533 = vrot.lane.b32.xlu0 %v527, 125
        %v534 = vpop.permute.xlu0 %533
        %535 = vrot.lane.b32.xlu0 %v519, 124
        %v536 = vpop.permute.xlu0 %535
        %537 = vrot.lane.b32.xlu0 %v528, 123
        %v538 = vpop.permute.xlu0 %537
        %vm539 = vcmask 1041408
        %v542 = vsel %vm539, %v481, %v500
        %vm543 = vcmask 1043456
        %v545 = vsel %vm543, %v542, %v503
        %vm546 = vcmask 1045504
        %v548 = vsel %vm546, %v545, %v506
        %v552 = vsel %vm539, %v508, %v510
        %v554 = vsel %vm543, %v552, %v519
        %v556 = vsel %vm546, %v554, %v530
        %v560 = vsel %vm539, %v532, %v534
        %v562 = vsel %vm543, %v560, %v536
        %v564 = vsel %vm546, %v562, %v538
        %v566 = vld [vmem:[%s3] sm:$0x3]
        %vm567 = vcmask 392192
        %v569 = vsel %vm567, %v566, 0
        %571 = vmatprep.subr.bf16.mxu0 0
        %572 = vmatpush1.bf16.msra.mxu0 %v548
        %573 = vmatprep.subr.bf16.mxu0 0
        %574 = vmatpush1.bf16.msra.mxu0 %v556
        %575 = vmatprep.subr.bf16.mxu0 0
        %576 = vmatpush1.bf16.msra.mxu0 %v564
        %577 = vmatprep.subr.bf16.mxu0 0
        %578 = vmatpush1.bf16.msra.mxu0 0
        %579 = vmatprep.subr.bf16.mxu0 0
        %580 = vmatpush1.bf16.msra.mxu0 0
        %581 = vmatprep.subr.bf16.mxu0 0
        %582 = vmatpush1.bf16.msra.mxu0 0
        %583 = vmatprep.subr.bf16.mxu0 0
        %584 = vmatpush1.bf16.msra.mxu0 0
        %585 = vmatprep.subr.bf16.mxu0 0
        %586 = vmatpush1.bf16.msra.mxu0 0
        %587 = vmatprep.subr.bf16.mxu0 0
        %588 = vmatpush1.bf16.msra.mxu0 0
        %589 = vmatprep.subr.bf16.mxu0 0
        %590 = vmatpush1.bf16.msra.mxu0 0
        %591 = vmatprep.subr.bf16.mxu0 0
        %592 = vmatpush1.bf16.msra.mxu0 0
        %593 = vmatprep.subr.bf16.mxu0 0
        %594 = vmatpush1.bf16.msra.mxu0 0
        %595 = vmatprep.subr.bf16.mxu0 0
        %596 = vmatpush1.bf16.msra.mxu0 0
        %597 = vmatprep.subr.bf16.mxu0 0
        %598 = vmatpush1.bf16.msra.mxu0 0
        %599 = vmatprep.subr.bf16.mxu0 0
        %600 = vmatpush1.bf16.msra.mxu0 0
        %601 = vmatprep.subr.bf16.mxu0 0
        %602 = vmatpush1.bf16.msra.mxu0 0
        %603 = vmatprep.mubr.bf16.mxu0 0
        %604 = vmatmul.mubr.bf16.gmra.mrb[0].mxu0 %v569
        %v605 = vpop.f32.mrb[0].mxu0
        %v606 = vadd.f32 0.0, %v605
        %v607 = vpop.f32.mrb[0].mxu0
        %v608 = vpop.f32.mrb[0].mxu0
        %v609 = vpop.f32.mrb[0].mxu0
        %610 = vdwg.mxu0
        %v611 = vld [vmem:[%s7] sm:$0x3]
        %v613 = vsel %vm567, %v611, 0
        %615 = vmatprep.subr.bf16.mxu0 0
        %616 = vmatpush1.bf16.msra.mxu0 %v548
        %617 = vmatprep.subr.bf16.mxu0 0
        %618 = vmatpush1.bf16.msra.mxu0 %v556
        %619 = vmatprep.subr.bf16.mxu0 0
        %620 = vmatpush1.bf16.msra.mxu0 %v564
        %621 = vmatprep.subr.bf16.mxu0 0
        %622 = vmatpush1.bf16.msra.mxu0 0
        %623 = vmatprep.subr.bf16.mxu0 0
        %624 = vmatpush1.bf16.msra.mxu0 0
        %625 = vmatprep.subr.bf16.mxu0 0
        %626 = vmatpush1.bf16.msra.mxu0 0
        %627 = vmatprep.subr.bf16.mxu0 0
        %628 = vmatpush1.bf16.msra.mxu0 0
        %629 = vmatprep.subr.bf16.mxu0 0
        %630 = vmatpush1.bf16.msra.mxu0 0
        %631 = vmatprep.subr.bf16.mxu0 0
        %632 = vmatpush1.bf16.msra.mxu0 0
        %633 = vmatprep.subr.bf16.mxu0 0
        %634 = vmatpush1.bf16.msra.mxu0 0
        %635 = vmatprep.subr.bf16.mxu0 0
        %636 = vmatpush1.bf16.msra.mxu0 0
        %637 = vmatprep.subr.bf16.mxu0 0
        %638 = vmatpush1.bf16.msra.mxu0 0
        %639 = vmatprep.subr.bf16.mxu0 0
        %640 = vmatpush1.bf16.msra.mxu0 0
        %641 = vmatprep.subr.bf16.mxu0 0
        %642 = vmatpush1.bf16.msra.mxu0 0
        %643 = vmatprep.subr.bf16.mxu0 0
        %644 = vmatpush1.bf16.msra.mxu0 0
        %645 = vmatprep.subr.bf16.mxu0 0
        %646 = vmatpush1.bf16.msra.mxu0 0
        %647 = vmatprep.mubr.bf16.mxu0 0
        %648 = vmatmul.mubr.bf16.gmra.mrb[0].mxu0 %v613
        %v649 = vpop.f32.mrb[0].mxu0
        %v650 = vadd.f32 0.0, %v649
        %v651 = vpop.f32.mrb[0].mxu0
        %v652 = vpop.f32.mrb[0].mxu0
        %v653 = vpop.f32.mrb[0].mxu0
        %654 = vdwg.mxu0
        %v655 = vld [vmem:[%s4] sm:$0xf]
        %657 = vset.pattern.permute.xlu0 0
        %658 = vperm.xlu0 %657, %v655
        %v659 = vpop.permute.xlu0 %658
        %v661 = vmul.f32 %v606, %v659
        %v662 = vld [vmem:[%s5] sm:$0xf]
        %664 = vset.pattern.permute.xlu0 0
        %665 = vperm.xlu0 %664, %v662
        %v666 = vpop.permute.xlu0 %665
        %v668 = vadd.f32 %v661, %v666
        %v669 = vmax.f32 %v668, 0.0
        %v670 = vlaneseq
        %v671 = vand.u32 %v670, 127
        %s672 = smul.u32 %s29, 17
        %s673 = ssub.s32 %s672, 2
        %v674 = vstv %s673
        %v675 = vadd.s32 %v671, %v674
        %vm676 = vcmp.ge.s32.totalorder %v675, 0
        %vm677 = vcmp.lt.s32.totalorder %v675, 17
        %vm678 = vmand %vm676, %vm677
        %v679 = vsel %vm678, %v669, 0.0
        %v680 = vpack.c.bf16 %v679, %v679
        %vm681 = vcmask 173056
        %682 = vst.msk [vmem:[#allocation3] sm:$0x3] %vm681, %v680
        %v683 = vld [vmem:[#allocation3] sm:$0x3]
        %v685 = vcombine.low %v683, %v683
        %v687 = vunpack.c.l.s4 1983009808
        %v688 = vunpack.c.0.s8 %v687
        %v689 = vlaneseq
        %v690 = vshrl.u32 %v689, 7
        %v691 = vsub.s32 %v688, %v690
        %v692 = vrot.slane %v685, %v691
        %v694 = vunpack.c.l.s4 1983009808
        %v695 = vunpack.c.0.s8 %v694
        %v696 = vlaneseq
        %v697 = vshrl.u32 %v696, 7
        %v698 = vsub.s32 %v695, %v697
        %v699 = vrot.slane %v683, %v698
        %700 = vrot.lane.b32.xlu0 %v692, 127
        %v701 = vpop.permute.xlu0 %700
        %v702 = vcombine.low %v699, %v699
        %703 = vrot.lane.b32.xlu0 %v702, 126
        %v704 = vpop.permute.xlu0 %703
        %v705 = vcombine.low %v692, %v692
        %706 = vrot.lane.b32.xlu0 %v705, 125
        %v707 = vpop.permute.xlu0 %706
        %708 = vrot.lane.b32.xlu0 %v699, 124
        %v709 = vpop.permute.xlu0 %708
        %710 = vrot.lane.b32.xlu0 %v692, 123
        %v711 = vpop.permute.xlu0 %710
        %v714 = vsel %vm539, %v683, %v701
        %v716 = vsel %vm543, %v714, %v704
        %v718 = vsel %vm546, %v716, %v707
        %v722 = vsel %vm539, %v709, %v711
        %v723 = vld [vmem:[%s6] sm:$0x3]
        %vm724 = vcmask 195584
        %v726 = vsel %vm724, %v723, 0
        %v728 = vsel %vm543, %v722, 0
        %730 = vmatprep.subr.bf16.mxu0 0
        %731 = vmatpush1.bf16.msra.mxu0 %v718
        %732 = vmatprep.subr.bf16.mxu0 0
        %733 = vmatpush1.bf16.msra.mxu0 %v728
        %734 = vmatprep.subr.bf16.mxu0 0
        %735 = vmatpush1.bf16.msra.mxu0 0
        %736 = vmatprep.subr.bf16.mxu0 0
        %737 = vmatpush1.bf16.msra.mxu0 0
        %738 = vmatprep.subr.bf16.mxu0 0
        %739 = vmatpush1.bf16.msra.mxu0 0
        %740 = vmatprep.subr.bf16.mxu0 0
        %741 = vmatpush1.bf16.msra.mxu0 0
        %742 = vmatprep.subr.bf16.mxu0 0
        %743 = vmatpush1.bf16.msra.mxu0 0
        %744 = vmatprep.subr.bf16.mxu0 0
        %745 = vmatpush1.bf16.msra.mxu0 0
        %746 = vmatprep.subr.bf16.mxu0 0
        %747 = vmatpush1.bf16.msra.mxu0 0
        %748 = vmatprep.subr.bf16.mxu0 0
        %749 = vmatpush1.bf16.msra.mxu0 0
        %750 = vmatprep.subr.bf16.mxu0 0
        %751 = vmatpush1.bf16.msra.mxu0 0
        %752 = vmatprep.subr.bf16.mxu0 0
        %753 = vmatpush1.bf16.msra.mxu0 0
        %754 = vmatprep.subr.bf16.mxu0 0
        %755 = vmatpush1.bf16.msra.mxu0 0
        %756 = vmatprep.subr.bf16.mxu0 0
        %757 = vmatpush1.bf16.msra.mxu0 0
        %758 = vmatprep.subr.bf16.mxu0 0
        %759 = vmatpush1.bf16.msra.mxu0 0
        %760 = vmatprep.subr.bf16.mxu0 0
        %761 = vmatpush1.bf16.msra.mxu0 0
        %762 = vmatprep.mubr.bf16.mxu0 0
        %763 = vmatmul.mubr.bf16.gmra.mrb[0].mxu0 %v726
        %v764 = vpop.f32.mrb[0].mxu0
        %v765 = vadd.f32 0.0, %v764
        %v766 = vpop.f32.mrb[0].mxu0
        %v767 = vpop.f32.mrb[0].mxu0
        %v768 = vpop.f32.mrb[0].mxu0
        %769 = vdwg.mxu0
        %771 = vrot.lane.b32.xlu0 %v765, 2
        %v772 = vpop.permute.xlu0 %771
        %v774 = vadd.f32 %v650, %v772
        %v775 = vld [vmem:[%s8] sm:$0xf]
        %777 = vset.pattern.permute.xlu0 0
        %778 = vperm.xlu0 %777, %v775
        %v779 = vpop.permute.xlu0 %778
        %v781 = vmul.f32 %v774, %v779
        %v782 = vld [vmem:[%s9] sm:$0xf]
        %784 = vset.pattern.permute.xlu0 0
        %785 = vperm.xlu0 %784, %v782
        %v786 = vpop.permute.xlu0 %785
        %v788 = vadd.f32 %v781, %v786
        %v789 = vmax.f32 %v788, 0.0
        %v790 = vpack.c.bf16 %v789, %v789
        %v793 = vunpack.c.l.s4 1983009808
        %v794 = vunpack.c.0.s8 %v793
        %v795 = vlaneseq
        %v796 = vshrl.u32 %v795, 7
        %v797 = vsub.s32 %v794, %v796
        %v798 = vrot.slane %v790, %v797
        %799 = vrot.lane.b32.xlu0 %v798, 126
        %v800 = vpop.permute.xlu0 %799
        %vm802 = vcmask 132096
        %803 = vst.msk [vmem:[%s397] sm:$0x3] %vm802, %v800
        %s804 = sand.u32 %s270, 1
        %s805 = scalar_lea.sflag [#allocation5], %s804
        %s806 = sand.u32 %s270, 1
        %s807 = smul.addr %s806, 2
        %s808 = scalar_lea.vmem [#allocation4], %s807
        // Predicated region
        $region61: #{decoder_block_pallas.1} parent=59 // pred_check
          %p809 = pneg %p280
        $region62: #{decoder_block_pallas.1} parent=59 // pred_check_branch
          %811 = sbr.rel (%p809) target = $region64
        $region63: #{decoder_block_pallas.1} parent=59 // pred_region
          %s813 = ssub.s32 32, 32
          %814 = vsyncadd %s805, %s813
          %s815 = sadd.s32 %s29, %s28
          %s816 = smul.addr %s815, 32
          %s817 = scalar_lea.hbm %s10, %s816
          %s819 = sshll.u32 %s808, 4
          %s820 = int_to_ptr.vmem [resolvable:$true] %s819
          %822 = dma.vmem_to_hbm [thread:$0]  %s820, 32, %s817, %s805
        $region64: #{decoder_block_pallas.1} parent=59 // pred_fallthru
          _
      $region60: #{decoder_block_pallas.1} parent=5 // pred_fallthru
        _
      %p823 = scmp.le.s32.totalorder 2, %s19
      // Predicated region
      $region65: #{decoder_block_pallas.1} parent=5 // pred_check
        %p824 = pneg %p823
      $region66: #{decoder_block_pallas.1} parent=5 // pred_check_branch
        %826 = sbr.rel (%p824) target = $region68
      $region67: #{decoder_block_pallas.1} parent=5 // pred_region
        %s827 = ssub.s32 %s19, 2
        // Predicated region
        $region69: #{decoder_block_pallas.1} parent=67 // pred_check
          %p828 = pneg %p286
        $region70: #{decoder_block_pallas.1} parent=67 // pred_check_branch
          %830 = sbr.rel (%p828) target = $region72
        $region71: #{decoder_block_pallas.1} parent=67 // pred_region
          %s831 = sand.u32 %s271, 1
          %s832 = scalar_lea.sflag [#allocation5], %s831
          %s833 = sand.u32 %s271, 1
          %s834 = smul.addr %s833, 2
          %s835 = scalar_lea.vmem [#allocation4], %s834
          %836 = dma.done %s832, 32
        $region72: #{decoder_block_pallas.1} parent=67 // pred_fallthru
          _
      $region68: #{decoder_block_pallas.1} parent=5 // pred_fallthru
        _
    $region6: #{decoder_block_pallas.1} parent=1 // loop_footer
      %s23 = sadd.s32 1, %s19
    $region7: #{decoder_block_pallas.1} parent=1 // loop_footer_branch
      %18 = sbr.rel target = $region3
    $region8: #{decoder_block_pallas.1} parent=1 // loop_exit
      _
    %837 = vsyncpa [#allocation5], 1
    %s838 = scalar_lea.sflag [#allocation5], 1
    %839 = vsyncpa %s838, 1

</llo_original>
